<compile_context>
chip_gen: v6e
topology: v6e:2x2x1
jax: 0.10.0
libtpu: 0.0.40
codegen_flags: <defaults>
</compile_context>

<pallas_src>
import functools

import jax
import jax.numpy as jnp
from jax.experimental import pallas as pl
from jax.experimental.pallas import tpu as pltpu

EPS = 1e-8
_VMEM_HEADROOM = 6 << 20  # leave slack for the compiler's own scratch


# --------------------------------------------------------------------------
# Hardware-aware sizing helpers.
# --------------------------------------------------------------------------
def _vmem_budget_bytes():
    try:
        cap = int(pltpu.get_tpu_info().vmem_capacity_bytes)
    except Exception:
        cap = 64 << 20  # conservative fallback: v7x per-TensorCore VMEM
    return max(16 << 20, cap - _VMEM_HEADROOM)


def _num_cores_hint():
    # Best-effort TensorCore-per-device count (v7x has 2); default to 1.
    try:
        return max(1, int(getattr(jax.devices()[0], "num_cores", 1)))
    except Exception:
        return 1


def _choose_tk(N, K, itemsize, target_bytes=2 << 20):
    """Pick a K tile (multiple of 128) so one (1, N, TK) block is ~2 MiB."""
    if K <= 256:
        return K  # single full-width tile (always a legal block shape)
    tk = target_bytes // max(1, N * itemsize)
    tk = int(min(max(tk, 128), 16384))
    tk = (tk // 128) * 128
    tk = min(tk, (K // 128) * 128)  # never exceed K; keep multiple of 128
    return max(128, tk)


def _buffered_spec(block_shape, index_map, buffers):
    """BlockSpec with deeper input pipelining, falling back if unsupported."""
    try:
        return pl.BlockSpec(block_shape, index_map, pipeline_mode=pl.Buffered(buffers))
    except Exception:
        return pl.BlockSpec(block_shape, index_map)


# --------------------------------------------------------------------------
# Fast path: whole (N, K) plane resident in VMEM, one grid step per batch.
# --------------------------------------------------------------------------
def gln_plane_kernel(gamma_ref, beta_ref, y_ref, o_ref):
    # y_ref: (1, N, K) block for one batch element.
    n, k = y_ref.shape[1], y_ref.shape[2]
    inv_count = jnp.float32(1.0 / (n * k))

    yf = y_ref[...].astype(jnp.float32)
    # Two-pass mean/variance (matches the PyTorch reference bit-for-bit in
    # structure; the second traversal only touches VMEM, so it is free on this
    # HBM-bound kernel).
    mean = jnp.sum(yf, axis=(1, 2), keepdims=True) * inv_count        # (1,1,1)
    centered = yf - mean
    var = jnp.sum(centered * centered, axis=(1, 2), keepdims=True) * inv_count
    inv_std = jax.lax.rsqrt(var + EPS)                                 # EUP

    gamma = gamma_ref[...].astype(jnp.float32)[None]                   # (1,N,1)
    beta = beta_ref[...].astype(jnp.float32)[None]                     # (1,N,1)
    scale = gamma * inv_std
    shift = beta - mean * scale

    o_ref[...] = (yf * scale + shift).astype(o_ref.dtype)


def _gln_plane(y, gamma, beta, vmem_limit):
    M, N, K = y.shape
    return pl.pallas_call(
        gln_plane_kernel,
        out_shape=jax.ShapeDtypeStruct((M, N, K), y.dtype),
        grid_spec=pltpu.PrefetchScalarGridSpec(
            num_scalar_prefetch=0,
            grid=(M,),
            in_specs=[
                pl.BlockSpec((N, 1), lambda m: (0, 0)),        # gamma (resident)
                pl.BlockSpec((N, 1), lambda m: (0, 0)),        # beta  (resident)
                pl.BlockSpec((1, N, K), lambda m: (m, 0, 0)),  # y, one batch plane
            ],
            out_specs=pl.BlockSpec((1, N, K), lambda m: (m, 0, 0)),
        ),
        compiler_params=pltpu.CompilerParams(
            dimension_semantics=("parallel",),
            vmem_limit_bytes=int(vmem_limit),
        ),
    )(gamma, beta, y)


# --------------------------------------------------------------------------
# K-tiled two-pass path.
# --------------------------------------------------------------------------
def gln_stats_kernel(y_ref, stats_ref, *, kpc, tk, total_k, need_mask):
    # stats_ref: (1, 1, 1, 2) resident accumulator [sum, sumsq] for (m, c).
    c = pl.program_id(1)
    k = pl.program_id(2)

    @pl.when(k == 0)
    def _():
        stats_ref[...] = jnp.zeros_like(stats_ref)

    yf = y_ref[...].astype(jnp.float32)                                # (1,N,TK)
    if need_mask:
        start = (c * kpc + k) * tk
        pos = start + jax.lax.broadcasted_iota(jnp.int32, yf.shape, 2)
        yf = jnp.where(pos < total_k, yf, 0.0)

    s = jnp.sum(yf, axis=(1, 2), keepdims=True)                        # (1,1,1)
    ss = jnp.sum(yf * yf, axis=(1, 2), keepdims=True)                  # (1,1,1)
    lane = jax.lax.broadcasted_iota(jnp.int32, stats_ref.shape, 3)     # (1,1,1,2)
    stats_ref[...] += jnp.where(lane == 0, s[:, :, :, None], ss[:, :, :, None])


def gln_apply_kernel(gamma_ref, beta_ref, stats_ref, y_ref, o_ref, *, inv_count):
    # Fused finalize + apply.  stats_ref (1, C, 1, 2) and gamma/beta are tiny
    # VMEM-resident blocks; recomputing scale/shift per tile is a handful of
    # VPU/EUP ops hidden under the HBM stream, and is safe under any
    # parallel-axis core sharding (no pl.when(k==0) state needed).
    stats = stats_ref[...]                                             # (1,C,1,2)
    total = jnp.sum(stats[:, :, :, 0:1])
    total_sq = jnp.sum(stats[:, :, :, 1:2])
    mean = total * jnp.float32(inv_count)
    var = jnp.maximum(total_sq * jnp.float32(inv_count) - mean * mean, 0.0)
    inv_std = jax.lax.rsqrt(var + EPS)

    gamma = gamma_ref[...].astype(jnp.float32)[None]                   # (1,N,1)
    beta = beta_ref[...].astype(jnp.float32)[None]
    scale = gamma * inv_std
    shift = beta - mean * scale

    o_ref[...] = (y_ref[...].astype(jnp.float32) * scale + shift).astype(o_ref.dtype)


def _gln_tiled(y, gamma, beta, tk, vmem_limit):
    M, N, K = y.shape
    kt_total = pl.cdiv(K, tk)
    # Small "parallel" chunk axis over the K tiles so both TensorCores on v7x
    # share the stats sweep (negligible cost on single-core chips).
    C = 2 if kt_total >= 2 else 1
    kpc = pl.cdiv(kt_total, C)
    has_excess = (C * kpc) != kt_total
    need_mask = (K % tk != 0) or has_excess

    def y_idx(m, c, k):
        t = c * kpc + k
        if has_excess:
            t = jnp.minimum(t, kt_total - 1)  # excess iterations are fully masked
        return (m, 0, t)

    # Pass 1: streaming read of y, scalar sum / sumsq per (batch, chunk).
    stats = pl.pallas_call(
        functools.partial(gln_stats_kernel, kpc=kpc, tk=tk, total_k=K,
                          need_mask=need_mask),
        out_shape=jax.ShapeDtypeStruct((M, C, 1, 2), jnp.float32),
        grid_spec=pltpu.PrefetchScalarGridSpec(
            num_scalar_prefetch=0,
            grid=(M, C, kpc),
            in_specs=[_buffered_spec((1, N, tk), y_idx, 3)],
            out_specs=pl.BlockSpec((1, 1, 1, 2), lambda m, c, k: (m, c, 0, 0)),
        ),
        compiler_params=pltpu.CompilerParams(
            dimension_semantics=("parallel", "parallel", "arbitrary"),
            vmem_limit_bytes=int(vmem_limit),
        ),
    )(y)

    # Pass 2: fused finalize + element-wise apply.  Both axes independent ->
    # "parallel" (shards K across the two TensorCores on v7x even when M == 1).
    inv_count = 1.0 / float(N * K)
    return pl.pallas_call(
        functools.partial(gln_apply_kernel, inv_count=inv_count),
        out_shape=jax.ShapeDtypeStruct((M, N, K), y.dtype),
        grid_spec=pltpu.PrefetchScalarGridSpec(
            num_scalar_prefetch=0,
            grid=(M, kt_total),
            in_specs=[
                pl.BlockSpec((N, 1), lambda m, k: (0, 0)),             # gamma
                pl.BlockSpec((N, 1), lambda m, k: (0, 0)),             # beta
                pl.BlockSpec((1, C, 1, 2), lambda m, k: (m, 0, 0, 0)),  # stats
                pl.BlockSpec((1, N, tk), lambda m, k: (m, 0, k)),       # y tile
            ],
            out_specs=pl.BlockSpec((1, N, tk), lambda m, k: (m, 0, k)),
        ),
        compiler_params=pltpu.CompilerParams(
            dimension_semantics=("parallel", "parallel"),
            vmem_limit_bytes=int(vmem_limit),
        ),
    )(gamma, beta, stats, y)


# --------------------------------------------------------------------------
# Public wrapper.
# --------------------------------------------------------------------------
def global_layer_norm(y, gamma, beta, *, force_tiled=False, tile_k=None,
                      num_cores=None):
    """y: [M, N, K]; gamma, beta: [N, 1] (or [1, N, 1]).

    Path selection and VMEM limits are derived from the chip's actual VMEM
    capacity; `num_cores` can override the TensorCore-count hint (v7x = 2).
    """
    M, N, K = y.shape
    gamma = gamma.reshape(N, 1)
    beta = beta.reshape(N, 1)

    budget = _vmem_budget_bytes()
    cores = _num_cores_hint() if num_cores is None else max(1, int(num_cores))
    itemsize = y.dtype.itemsize

    # Plane path budget: double-buffered in + out blocks plus f32 working set.
    plane_io = N * K * itemsize
    plane_f32 = N * K * 4
    plane_need = 4 * plane_io + 2 * plane_f32 + (2 << 20)
    plane_fits = plane_need <= budget

    tk = int(tile_k) if tile_k is not None else _choose_tk(N, K, itemsize)
    kt_total = pl.cdiv(K, tk)

    use_plane = plane_fits and not force_tiled
    # On multi-TensorCore chips with fewer batch elements than cores, the plane
    # path (grid over M only) leaves cores idle; the tiled path shards K.
    if use_plane and cores > 1 and M < cores and kt_total >= 2:
        use_plane = False

    if use_plane:
        vmem_limit = min(budget, max(plane_need, 16 << 20))
        return _gln_plane(y, gamma, beta, vmem_limit)

    tile_io = N * tk * itemsize
    tile_f32 = N * tk * 4
    tiled_need = 5 * tile_io + 3 * tile_f32 + (4 << 20)
    vmem_limit = min(budget, max(tiled_need, 16 << 20))
    return _gln_tiled(y, gamma, beta, tk, vmem_limit)


def gln_reference(y, gamma, beta):
    y32 = y.astype(jnp.float32)
    mean = jnp.mean(y32, axis=(1, 2), keepdims=True)
    var = jnp.mean((y32 - mean) ** 2, axis=(1, 2), keepdims=True)
    g = gamma.reshape(1, -1, 1).astype(jnp.float32)
    b = beta.reshape(1, -1, 1).astype(jnp.float32)
    return (g * (y32 - mean) / jnp.sqrt(var + EPS) + b).astype(y.dtype)


if __name__ == "__main__":
    key = jax.random.PRNGKey(0)
    k1, k2, k3, k4, k5 = jax.random.split(key, 5)

    # --- 1) plane-resident fast path: [batch, channel, time] = [2, 4, 16] ----
    M, N, K = 2, 4, 16
    y = jax.random.normal(k1, (M, N, K), dtype=jnp.float32)
    gamma = jnp.ones((N, 1), dtype=jnp.float32)   # reset_parameters(): gamma = 1
    beta = jnp.zeros((N, 1), dtype=jnp.float32)   #                     beta  = 0
    out = global_layer_norm(y, gamma, beta)
    jax.block_until_ready(out)
    ref = gln_reference(y, gamma, beta)
    assert out.shape == (M, N, K)
    assert jnp.allclose(out, ref, atol=1e-5, rtol=1e-5)

    # --- 2) tiled path, K not a multiple of 128 (tail masking, C=2 stats) ----
    M2, N2, K2 = 2, 8, 700
    y2 = jax.random.normal(k2, (M2, N2, K2), dtype=jnp.float32)
    gamma2 = jax.random.normal(k3, (N2, 1), dtype=jnp.float32)
    beta2 = jax.random.normal(k4, (N2, 1), dtype=jnp.float32)
    out2 = global_layer_norm(y2, gamma2, beta2, force_tiled=True)
    jax.block_until_ready(out2)
    ref2 = gln_reference(y2, gamma2, beta2)
    assert out2.shape == (M2, N2, K2)
    assert jnp.allclose(out2, ref2, atol=1e-5, rtol=1e-5)

    # --- 3) tiled path, multi-tile K, explicit TK (no masking needed) --------
    M3, N3, K3 = 2, 16, 512
    y3 = jax.random.normal(k5, (M3, N3, K3), dtype=jnp.float32)
    gamma3 = jnp.ones((N3, 1), dtype=jnp.float32)
    beta3 = jnp.zeros((N3, 1), dtype=jnp.float32)
    out3 = global_layer_norm(y3, gamma3, beta3, force_tiled=True, tile_k=128)
    jax.block_until_ready(out3)
    ref3 = gln_reference(y3, gamma3, beta3)
    assert out3.shape == (M3, N3, K3)
    assert jnp.allclose(out3, ref3, atol=1e-5, rtol=1e-5)

    print("KERNEL_OK")
</pallas_src>

<mosaic_0001>
module attributes {stable_mosaic.version = 11 : i64} {
  func.func @gln_plane_kernel(%arg0: i32, %arg1: memref<4x1xf32, #tpu.memory_space<vmem>>, %arg2: memref<4x1xf32, #tpu.memory_space<vmem>>, %arg3: memref<1x4x16xf32, #tpu.memory_space<vmem>>, %arg4: memref<1x4x16xf32, #tpu.memory_space<vmem>>) attributes {dimension_semantics = [#tpu.dimension_semantics<parallel>], iteration_bounds = array<i64: 2>, scalar_prefetch = 0 : i64, scratch_operands = 0 : i64, tpu.core_type = #tpu.core_type<tc>, window_params = [{pipeline_mode = #tpu.pipeline_mode<synchronous>, transform_indices = @transform_0, window_bounds = array<i64: 4, 1>}, {pipeline_mode = #tpu.pipeline_mode<synchronous>, transform_indices = @transform_1, window_bounds = array<i64: 4, 1>}, {transform_indices = @transform_2, window_bounds = array<i64: 1, 4, 16>}, {transform_indices = @transform_3, window_bounds = array<i64: 1, 4, 16>}]} {
    %c0 = arith.constant 0 : index
    %c0_0 = arith.constant 0 : index
    %c0_1 = arith.constant 0 : index
    %0 = vector.load %arg3[%c0, %c0_0, %c0_1] : memref<1x4x16xf32, #tpu.memory_space<vmem>>, vector<1x4x16xf32>
    %cst = arith.constant dense<0.000000e+00> : vector<1xf32>
    %1 = vector.multi_reduction <add>, %0, %cst [1, 2] : vector<1x4x16xf32> to vector<1xf32>
    %2 = vector.shape_cast %1 : vector<1xf32> to vector<1x1x1xf32>
    %cst_2 = arith.constant 1.562500e-02 : f32
    %3 = vector.broadcast %cst_2 : f32 to vector<1x1x1xf32>
    %4 = arith.mulf %2, %3 : vector<1x1x1xf32>
    %5 = vector.broadcast %4 : vector<1x1x1xf32> to vector<1x4x16xf32>
    %6 = arith.subf %0, %5 : vector<1x4x16xf32>
    %7 = arith.mulf %6, %6 : vector<1x4x16xf32>
    %cst_3 = arith.constant dense<0.000000e+00> : vector<1xf32>
    %8 = vector.multi_reduction <add>, %7, %cst_3 [1, 2] : vector<1x4x16xf32> to vector<1xf32>
    %9 = vector.shape_cast %8 : vector<1xf32> to vector<1x1x1xf32>
    %cst_4 = arith.constant 1.562500e-02 : f32
    %10 = vector.broadcast %cst_4 : f32 to vector<1x1x1xf32>
    %11 = arith.mulf %9, %10 : vector<1x1x1xf32>
    %cst_5 = arith.constant 9.99999993E-9 : f32
    %12 = vector.broadcast %cst_5 : f32 to vector<1x1x1xf32>
    %13 = arith.addf %11, %12 : vector<1x1x1xf32>
    %14 = math.rsqrt %13 : vector<1x1x1xf32>
    %c0_6 = arith.constant 0 : index
    %c0_7 = arith.constant 0 : index
    %15 = vector.load %arg1[%c0_6, %c0_7] : memref<4x1xf32, #tpu.memory_space<vmem>>, vector<4x1xf32>
    %16 = vector.shape_cast %15 : vector<4x1xf32> to vector<1x4x1xf32>
    %c0_8 = arith.constant 0 : index
    %c0_9 = arith.constant 0 : index
    %17 = vector.load %arg2[%c0_8, %c0_9] : memref<4x1xf32, #tpu.memory_space<vmem>>, vector<4x1xf32>
    %18 = vector.shape_cast %17 : vector<4x1xf32> to vector<1x4x1xf32>
    %19 = vector.broadcast %14 : vector<1x1x1xf32> to vector<1x4x1xf32>
    %20 = arith.mulf %16, %19 : vector<1x4x1xf32>
    %21 = vector.broadcast %4 : vector<1x1x1xf32> to vector<1x4x1xf32>
    %22 = arith.mulf %21, %20 : vector<1x4x1xf32>
    %23 = arith.subf %18, %22 : vector<1x4x1xf32>
    %24 = vector.broadcast %20 : vector<1x4x1xf32> to vector<1x4x16xf32>
    %25 = arith.mulf %0, %24 : vector<1x4x16xf32>
    %26 = vector.broadcast %23 : vector<1x4x1xf32> to vector<1x4x16xf32>
    %27 = arith.addf %25, %26 : vector<1x4x16xf32>
    %c0_10 = arith.constant 0 : index
    %c0_11 = arith.constant 0 : index
    %c0_12 = arith.constant 0 : index
    %28 = vector.load %arg4[%c0_10, %c0_11, %c0_12] : memref<1x4x16xf32, #tpu.memory_space<vmem>>, vector<1x4x16xf32>
    tpu.vector_store %arg4[%c0_10, %c0_11, %c0_12], %27 {strides = array<i32>} : memref<1x4x16xf32, #tpu.memory_space<vmem>>, vector<1x4x16xf32>,
    return
  }
  func.func @transform_0(%arg0: i32) -> (i32, i32) {
    %c0_i32 = arith.constant 0 : i32
    %c0_i32_0 = arith.constant 0 : i32
    %c0_i32_1 = arith.constant 0 : i32
    return %c0_i32, %c0_i32_0 : i32, i32
  }
  func.func @transform_1(%arg0: i32) -> (i32, i32) {
    %c0_i32 = arith.constant 0 : i32
    %c0_i32_0 = arith.constant 0 : i32
    %c0_i32_1 = arith.constant 0 : i32
    return %c0_i32, %c0_i32_0 : i32, i32
  }
  func.func @transform_2(%arg0: i32) -> (i32, i32, i32) {
    %c0_i32 = arith.constant 0 : i32
    %c0_i32_0 = arith.constant 0 : i32
    %c0_i32_1 = arith.constant 0 : i32
    return %arg0, %c0_i32, %c0_i32_0 : i32, i32, i32
  }
  func.func @transform_3(%arg0: i32) -> (i32, i32, i32) {
    %c0_i32 = arith.constant 0 : i32
    %c0_i32_0 = arith.constant 0 : i32
    %c0_i32_1 = arith.constant 0 : i32
    return %arg0, %c0_i32, %c0_i32_0 : i32, i32, i32
  }
}

</mosaic_0001>

<llo_original>
// kernel: tpu_custom_call.1
$region0: #{tpu_custom_call.1}
  #allocation0 [shape = 'u32[]', space=smem, size = 0x4, offset = 0x4, fixed_abs, tag = 'smem constant byte address 0x4 - core index']
  #allocation1 [shape = 'u32[144,128]{1,0:T(1,128)}', space=vmem, size = 0x12000, scoped, tag = 'internal scratch']
  %s0 = inlined_call_operand.vmem [shape: f32[4,1], index: 0, kind: input, shape index: {}]
  %s1 = inlined_call_operand.vmem [shape: f32[4,1], index: 1, kind: input, shape index: {}]
  %s2 = inlined_call_operand.vmem [shape: f32[2,4,16], index: 2, kind: input, shape index: {}]
  %s3 = inlined_call_operand.hbm [shape: f32[2,4,16], index: 3, kind: output, shape index: {}]
  %s4 = sld [smem:[#allocation0]]
  $region45: #{tpu_custom_call.1} parent=0
    _
  %s6 = ssub.s32 1, %s4
  %s7 = scalar_select 0, %s6, %s4
  $region1: #{tpu_custom_call.1} parent=0
    #allocation2 [shape = 'u8[4096]{0}', space=vmem, size = 0x1000, scoped, tag = 'output window, operand 0']
    #allocation3 [shape = 's32[2]{0}', space=sflag, size = 0x8, scoped, tag = 'scoped memory for tpu_custom_call.1']
    %8 = vsyncpa [#allocation3], 0
    %s9 = scalar_lea.sflag [#allocation3], 1
    %10 = vsyncpa %s9, 0
    loop: start=0, step=1, limit=4
    $region2: #{tpu_custom_call.1} parent=1 // loop_pre_header
      _
    $region3: #{tpu_custom_call.1} parent=1 // loop_header
      %s12 = sphi 0, %s16
      %p13 = scmp.ge.s32.totalorder %s12, 4
      %s20 = sphi 0, %s20
      %s22 = sphi 0, %s20
      %s23 = sphi 0, %s22
      %s37 = sphi 0, %s23
      %s41 = sphi 0, %s41
      %s43 = sphi 0, %s41
      %s44 = sphi 0, %s43
      %s58 = sphi 0, %s44
      %s64 = sphi 0, %s66
      %s67 = sphi 0, %s64
      %s68 = sphi 0, %s67
      %s84 = sphi 0, %s68
      %s90 = sphi 0, %s92
      %s93 = sphi 0, %s90
      %s94 = sphi 0, %s93
      %s110 = sphi 0, %s94
    $region4: #{tpu_custom_call.1} parent=1 // loop_header_branch
      %15 = sbr.rel (%p13) target = $region8
    $region5: #{tpu_custom_call.1} parent=1 // loop_body
      %s17 = ssub.s32 %s12, 1
      %s18 = ssub.s32 %s12, 2
      %s19 = sadd.s32 %s12, 1
      %s21 = sadd.s32 %s20, 1
      %p24 = scmp.eq.s32.totalorder %s12, 1
      %p25 = scmp.ne.s32.totalorder %s20, %s22
      %p26 = scmp.eq.s32.totalorder %s12, 0
      %p27 = por %p25, %p26
      %p28 = scmp.ne.s32.totalorder %s20, %s22
      %p29 = scmp.eq.s32.totalorder %s17, 1
      %p30 = por %p28, %p29
      %p31 = scmp.ne.s32.totalorder %s22, %s23
      %p32 = scmp.eq.s32.totalorder %s17, 0
      %p33 = por %p31, %p32
      %p34 = scmp.ne.s32.totalorder %s22, %s23
      %p35 = scmp.eq.s32.totalorder %s18, 1
      %p36 = por %p34, %p35
      %p38 = scmp.ne.s32.totalorder %s23, %s37
      %p39 = scmp.eq.s32.totalorder %s18, 0
      %p40 = por %p38, %p39
      %s42 = sadd.s32 %s41, 1
      %p45 = scmp.eq.s32.totalorder %s12, 1
      %p46 = scmp.ne.s32.totalorder %s41, %s43
      %p47 = scmp.eq.s32.totalorder %s12, 0
      %p48 = por %p46, %p47
      %p49 = scmp.ne.s32.totalorder %s41, %s43
      %p50 = scmp.eq.s32.totalorder %s17, 1
      %p51 = por %p49, %p50
      %p52 = scmp.ne.s32.totalorder %s43, %s44
      %p53 = scmp.eq.s32.totalorder %s17, 0
      %p54 = por %p52, %p53
      %p55 = scmp.ne.s32.totalorder %s43, %s44
      %p56 = scmp.eq.s32.totalorder %s18, 1
      %p57 = por %p55, %p56
      %p59 = scmp.ne.s32.totalorder %s44, %s58
      %p60 = scmp.eq.s32.totalorder %s18, 0
      %p61 = por %p59, %p60
      %s62 = ssub.s32 %s12, %s19
      %p63 = scmp.eq.s32.totalorder %s62, 0
      %s65 = sadd.s32 %s64, 1
      %s66 = scalar_select %p63, %s64, %s65
      %p69 = pneg %p63
      %p70 = scmp.eq.s32.totalorder %s12, 1
      %p71 = por %p69, %p70
      %p72 = scmp.ne.s32.totalorder %s64, %s67
      %p73 = scmp.eq.s32.totalorder %s12, 0
      %p74 = por %p72, %p73
      %p75 = scmp.ne.s32.totalorder %s64, %s67
      %p76 = scmp.eq.s32.totalorder %s17, 1
      %p77 = por %p75, %p76
      %p78 = scmp.ne.s32.totalorder %s67, %s68
      %p79 = scmp.eq.s32.totalorder %s17, 0
      %p80 = por %p78, %p79
      %p81 = scmp.ne.s32.totalorder %s67, %s68
      %p82 = scmp.eq.s32.totalorder %s18, 1
      %p83 = por %p81, %p82
      %p85 = scmp.ne.s32.totalorder %s68, %s84
      %p86 = scmp.eq.s32.totalorder %s18, 0
      %p87 = por %p85, %p86
      %s88 = ssub.s32 %s12, %s19
      %p89 = scmp.eq.s32.totalorder %s88, 0
      %s91 = sadd.s32 %s90, 1
      %s92 = scalar_select %p89, %s90, %s91
      %p95 = pneg %p89
      %p96 = scmp.eq.s32.totalorder %s12, 1
      %p97 = por %p95, %p96
      %p98 = scmp.ne.s32.totalorder %s90, %s93
      %p99 = scmp.eq.s32.totalorder %s12, 0
      %p100 = por %p98, %p99
      %p101 = scmp.ne.s32.totalorder %s90, %s93
      %p102 = scmp.eq.s32.totalorder %s17, 1
      %p103 = por %p101, %p102
      %p104 = scmp.ne.s32.totalorder %s93, %s94
      %p105 = scmp.eq.s32.totalorder %s17, 0
      %p106 = por %p104, %p105
      %p107 = scmp.ne.s32.totalorder %s93, %s94
      %p108 = scmp.eq.s32.totalorder %s18, 1
      %p109 = por %p107, %p108
      %p111 = scmp.ne.s32.totalorder %s94, %s110
      %p112 = scmp.eq.s32.totalorder %s18, 0
      %p113 = por %p111, %p112
      %p114 = scmp.le.s32.totalorder 1, %s12
      %p115 = scmp.lt.s32.totalorder %s12, 3
      %p116 = pnand %p114, %p115
      %p117 = pneg %p116
      // Predicated region
      $region9: #{tpu_custom_call.1} parent=5 // pred_check
        _
      $region10: #{tpu_custom_call.1} parent=5 // pred_check_branch
        %119 = sbr.rel (%p116) target = $region12
      $region11: #{tpu_custom_call.1} parent=5 // pred_region
        %s120 = ssub.s32 %s12, 1
        // Predicated region
        $region13: #{tpu_custom_call.1} parent=11 // pred_check
          %p121 = pneg %p33
        $region14: #{tpu_custom_call.1} parent=11 // pred_check_branch
          %123 = sbr.rel (%p121) target = $region16
        $region15: #{tpu_custom_call.1} parent=11 // pred_region
          _
        $region16: #{tpu_custom_call.1} parent=11 // pred_fallthru
          _
        // Predicated region
        $region17: #{tpu_custom_call.1} parent=11 // pred_check
          %p124 = pneg %p54
        $region18: #{tpu_custom_call.1} parent=11 // pred_check_branch
          %126 = sbr.rel (%p124) target = $region20
        $region19: #{tpu_custom_call.1} parent=11 // pred_region
          _
        $region20: #{tpu_custom_call.1} parent=11 // pred_fallthru
          _
      $region12: #{tpu_custom_call.1} parent=5 // pred_fallthru
        _
      %p127 = scmp.lt.s32.totalorder %s12, 2
      // Predicated region
      $region21: #{tpu_custom_call.1} parent=5 // pred_check
        %p128 = pneg %p127
      $region22: #{tpu_custom_call.1} parent=5 // pred_check_branch
        %130 = sbr.rel (%p128) target = $region24
      $region23: #{tpu_custom_call.1} parent=5 // pred_region
        // Predicated region
        $region25: #{tpu_custom_call.1} parent=23 // pred_check
          %p131 = pneg %p74
        $region26: #{tpu_custom_call.1} parent=23 // pred_check_branch
          %133 = sbr.rel (%p131) target = $region28
        $region27: #{tpu_custom_call.1} parent=23 // pred_region
          %p134 = scmp.lt.s32.totalorder %s12, 1
          %s135 = scalar_select %p134, %s12, 1
          %s136 = smul.addr %s135, 4
          %s137 = scalar_lea.vmem %s2, %s136
        $region28: #{tpu_custom_call.1} parent=23 // pred_fallthru
          _
      $region24: #{tpu_custom_call.1} parent=5 // pred_fallthru
        _
      %p138 = scmp.le.s32.totalorder 1, %s12
      %p139 = scmp.lt.s32.totalorder %s12, 3
      %p140 = pnand %p138, %p139
      %p141 = pneg %p140
      // Predicated region
      $region29: #{tpu_custom_call.1} parent=5 // pred_check
        _
      $region30: #{tpu_custom_call.1} parent=5 // pred_check_branch
        %143 = sbr.rel (%p140) target = $region32
      $region31: #{tpu_custom_call.1} parent=5 // pred_region
        %s144 = ssub.s32 %s12, 1
        %p145 = pneg %p33
        %p146 = pneg %p30
        %p147 = pneg %p54
        %p148 = pneg %p51
        %p149 = scmp.lt.s32.totalorder %s17, 1
        %s150 = scalar_select %p149, %s17, 1
        %s151 = smul.addr %s150, 4
        %s152 = scalar_lea.vmem %s2, %s151
        %p153 = pneg %p80
        %p154 = pneg %p77
        %p155 = pneg %p106
        %p156 = pneg %p103
        %s157 = sand.u32 %s93, 1
        %s158 = scalar_lea.sflag [#allocation3], %s157
        %s159 = sand.u32 %s93, 1
        %s160 = smul.addr %s159, 4
        %s161 = scalar_lea.vmem [#allocation2], %s160
        %p162 = scmp.lt.s32.totalorder %s17, 1
        %s163 = scalar_select %p162, %s17, 1
        %s164 = smul.addr %s163, 4
        %s165 = scalar_lea.vmem %s2, %s164
        %v166 = vld [vmem:[%s165] sm:$0xf]
        %vm167 = vcmask 125952
        %v168 = vsel %vm167, %v166, 0.0
        %169 = vadd.xlane.f32.xlu0 %v168
        %v170 = vpop.xlane.xlu0 %169
        %v171 = vrot.slane %v170, 4
        %v172 = vadd.f32 %v170, %v171
        %v173 = vrot.slane %v172, 2
        %v174 = vadd.f32 %v172, %v173
        %v175 = vrot.slane %v174, 1
        %v176 = vadd.f32 %v174, %v175
        %v177 = vmul.f32 %v176, 0.015625
        %v178 = vsub.f32 %v166, %v177
        %v179 = vmul.f32 %v178, %v178
        %v180 = vsel %vm167, %v179, 0.0
        %181 = vadd.xlane.f32.xlu0 %v180
        %v182 = vpop.xlane.xlu0 %181
        %v183 = vrot.slane %v182, 4
        %v184 = vadd.f32 %v182, %v183
        %v185 = vrot.slane %v184, 2
        %v186 = vadd.f32 %v184, %v185
        %v187 = vrot.slane %v186, 1
        %v188 = vadd.f32 %v186, %v187
        %v189 = vmul.f32 %v188, 0.015625
        %v190 = vadd.f32 %v189, 1e-08
        %v191 = vrsqrt.pop %v190
        %v192 = vld [vmem:[%s0] sm:$0xf]
        %v193 = vld [vmem:[%s1] sm:$0xf]
        %v194 = vmul.f32 %v192, %v191
        %v195 = vmul.f32 %v177, %v194
        %v196 = vsub.f32 %v193, %v195
        %198 = vset.pattern.permute.xlu0 0
        %199 = vperm.xlu0 %198, %v194
        %v200 = vpop.permute.xlu0 %199
        %v202 = vmul.f32 %v166, %v200
        %204 = vset.pattern.permute.xlu0 0
        %205 = vperm.xlu0 %204, %v196
        %v206 = vpop.permute.xlu0 %205
        %v208 = vadd.f32 %v202, %v206
        %209 = vst.msk [vmem:[%s161] sm:$0xf] %vm167, %v208
        %s210 = sand.u32 %s93, 1
        %s211 = scalar_lea.sflag [#allocation3], %s210
        %s212 = sand.u32 %s93, 1
        %s213 = smul.addr %s212, 4
        %s214 = scalar_lea.vmem [#allocation2], %s213
        // Predicated region
        $region33: #{tpu_custom_call.1} parent=31 // pred_check
          %p215 = pneg %p103
        $region34: #{tpu_custom_call.1} parent=31 // pred_check_branch
          %217 = sbr.rel (%p215) target = $region36
        $region35: #{tpu_custom_call.1} parent=31 // pred_region
          %s219 = ssub.s32 64, 64
          %220 = vsyncadd %s211, %s219
          %s221 = smul.addr %s17, 64
          %s222 = scalar_lea.hbm %s3, %s221
          %s224 = sshll.u32 %s214, 4
          %s225 = int_to_ptr.vmem [resolvable:$true] %s224
          %227 = dma.vmem_to_hbm [thread:$0]  %s225, 64, %s222, %s211
        $region36: #{tpu_custom_call.1} parent=31 // pred_fallthru
          _
      $region32: #{tpu_custom_call.1} parent=5 // pred_fallthru
        _
      %p228 = scmp.le.s32.totalorder 2, %s12
      // Predicated region
      $region37: #{tpu_custom_call.1} parent=5 // pred_check
        %p229 = pneg %p228
      $region38: #{tpu_custom_call.1} parent=5 // pred_check_branch
        %231 = sbr.rel (%p229) target = $region40
      $region39: #{tpu_custom_call.1} parent=5 // pred_region
        %s232 = ssub.s32 %s12, 2
        // Predicated region
        $region41: #{tpu_custom_call.1} parent=39 // pred_check
          %p233 = pneg %p109
        $region42: #{tpu_custom_call.1} parent=39 // pred_check_branch
          %235 = sbr.rel (%p233) target = $region44
        $region43: #{tpu_custom_call.1} parent=39 // pred_region
          %s236 = sand.u32 %s94, 1
          %s237 = scalar_lea.sflag [#allocation3], %s236
          %s238 = sand.u32 %s94, 1
          %s239 = smul.addr %s238, 4
          %s240 = scalar_lea.vmem [#allocation2], %s239
          %241 = dma.done %s237, 64
        $region44: #{tpu_custom_call.1} parent=39 // pred_fallthru
          _
      $region40: #{tpu_custom_call.1} parent=5 // pred_fallthru
        _
    $region6: #{tpu_custom_call.1} parent=1 // loop_footer
      %s16 = sadd.s32 1, %s12
    $region7: #{tpu_custom_call.1} parent=1 // loop_footer_branch
      %11 = sbr.rel target = $region3
    $region8: #{tpu_custom_call.1} parent=1 // loop_exit
      _
    %242 = vsyncpa [#allocation3], 1
    %s243 = scalar_lea.sflag [#allocation3], 1
    %244 = vsyncpa %s243, 1

</llo_original>
